<compile_context>
chip_gen: v6e
topology: v6e:2x2x1
jax: 0.10.0
libtpu: 0.0.40
codegen_flags: <defaults>
</compile_context>

<pallas_src>
import functools

import jax
import jax.numpy as jnp
from jax.experimental import pallas as pl
from jax.experimental.pallas import tpu as pltpu

_LANE = 128
_MAX_HW_TILE = 16384   # caps the number of unrolled 128-lane chunks per grid step


def _round_up(a, b):
    return (a + b - 1) // b * b


def _cdiv(a, b):
    return -(-a // b)


def _vmem_capacity_bytes():
    try:
        cap = getattr(pltpu.get_tpu_info(), "vmem_capacity_bytes", None)
        if cap:
            return int(cap)
    except Exception:
        pass
    try:
        kind = jax.devices()[0].device_kind.lower()
    except Exception:
        kind = ""
    if "v7" in kind:
        return 64 * 1024 * 1024
    return 128 * 1024 * 1024


def _vmem_budgets():
    cap = _vmem_capacity_bytes()
    budget = min(int(cap * 0.70), 96 * 1024 * 1024)    # what we size our buffers against
    limit = min(int(cap * 0.85), 112 * 1024 * 1024)    # scoped limit handed to Mosaic
    return budget, limit


def _pick_hw_tile(hw, bytes_per_col, budget_bytes, max_hw_tile):
    """Largest 128-multiple HW tile that fits the byte budget, balanced so the padded
    tail (HW rounded up to the tile) is as small as possible."""
    hw_cap = max(_LANE, _round_up(hw, _LANE))
    cap = min(hw_cap, max_hw_tile)
    max_tile = (budget_bytes // max(bytes_per_col, 1) // _LANE) * _LANE
    max_tile = max(_LANE, min(max_tile, cap))
    steps = _cdiv(hw, max_tile)
    tile = _round_up(_cdiv(hw, steps), _LANE)
    return min(tile, max_tile)


# ---------------------------------------------------------------------------
# Kernel bodies
# ---------------------------------------------------------------------------

def _accumulate_chunks(x_ref, sum_sc, max_sc, hw_tile, mask_tail):
    """Add one (..., hw_tile) block into lane-wide f32 running sum/max accumulators.

    mask_tail: static number of valid elements in this block, or None if fully valid.
    Zero padding never perturbs the sum; only the max needs the -inf mask, and only on
    the single boundary 128-lane chunk. Fully-padded chunks are skipped entirely.
    """
    ndim = len(sum_sc.shape)
    iota_shape = (1,) * (ndim - 1) + (_LANE,)
    for j in range(hw_tile // _LANE):
        lo = j * _LANE
        if mask_tail is not None and lo >= mask_tail:
            break                                      # pure padding: skip
        idx = (slice(None),) * (ndim - 1) + (slice(lo, lo + _LANE),)
        xc = x_ref[idx].astype(jnp.float32)
        sum_sc[...] += xc                              # zero padding adds 0
        if mask_tail is not None and lo + _LANE > mask_tail:
            lane = jax.lax.broadcasted_iota(jnp.int32, iota_shape, ndim - 1)
            xc = jnp.where(lane < (mask_tail - lo), xc, -jnp.inf)
        max_sc[...] = jnp.maximum(max_sc[...], xc)


def _reduce_hw_block(x_ref, sum_sc, max_sc, *, hw_tile, hw_steps, tail_valid):
    """Init (hw step 0) + accumulate the current HW block into running sum/max."""
    hw = pl.program_id(1)
    last = hw_steps - 1

    @pl.when(hw == 0)
    def _init():
        sum_sc[...] = jnp.zeros_like(sum_sc)
        max_sc[...] = jnp.full_like(max_sc, -jnp.inf)

    if tail_valid == hw_tile:            # HW is padding-free: never mask
        _accumulate_chunks(x_ref, sum_sc, max_sc, hw_tile, None)
    elif hw_steps == 1:                  # single (partially padded) block
        _accumulate_chunks(x_ref, sum_sc, max_sc, hw_tile, tail_valid)
    else:                                # mask only on the last HW step
        @pl.when(hw != last)
        def _bulk():
            _accumulate_chunks(x_ref, sum_sc, max_sc, hw_tile, None)

        @pl.when(hw == last)
        def _tail():
            _accumulate_chunks(x_ref, sum_sc, max_sc, hw_tile, tail_valid)


def _row_pool_kernel(x_ref, avg_ref, max_ref, sum_sc, max_sc, *,
                     hw_valid, hw_tile, hw_steps, tail_valid):
    # Small-C path. x_ref: (row_tile, hw_tile) where rows = N*C collapsed onto sublanes.
    # avg_ref / max_ref: (row_tile, 1) f32. sum_sc / max_sc: (row_tile, 128) f32.
    _reduce_hw_block(x_ref, sum_sc, max_sc,
                     hw_tile=hw_tile, hw_steps=hw_steps, tail_valid=tail_valid)

    @pl.when(pl.program_id(1) == hw_steps - 1)
    def _finalize():
        avg_ref[...] = jnp.sum(sum_sc[...], axis=-1, keepdims=True) * (1.0 / hw_valid)
        max_ref[...] = jnp.max(max_sc[...], axis=-1, keepdims=True)


def _fused_pool_conv_kernel(x_ref, wavg_ref, wmax_ref, b_ref, o_ref, sum_sc, max_sc, *,
                            hw_valid, hw_tile, hw_steps, tail_valid):
    # General path. x_ref: (n_tile, C, hw_tile); wavg/wmax: (C, Cout) f32; b: (1, Cout).
    # o_ref: (n_tile, 1, Cout). sum_sc / max_sc: (n_tile, C, 128) f32.
    _reduce_hw_block(x_ref, sum_sc, max_sc,
                     hw_tile=hw_tile, hw_steps=hw_steps, tail_valid=tail_valid)

    @pl.when(pl.program_id(1) == hw_steps - 1)
    def _finalize():
        avg = jnp.sum(sum_sc[...], axis=-1) * (1.0 / hw_valid)       # (n_tile, C)
        mx = jnp.max(max_sc[...], axis=-1)                           # (n_tile, C)
        # Split weights avoid a lane-axis concat; both dots hit the MXU once per tile.
        y = jnp.dot(avg, wavg_ref[...], preferred_element_type=jnp.float32)
        y = y + jnp.dot(mx, wmax_ref[...], preferred_element_type=jnp.float32)
        y = y + b_ref[...]
        o_ref[...] = jax.nn.sigmoid(y)[:, None, :].astype(o_ref.dtype)


# ---------------------------------------------------------------------------
# Wrappers
# ---------------------------------------------------------------------------

def _split_weight(weight, bias, C):
    Cout = weight.shape[0]
    w = weight.reshape(Cout, 2 * C).astype(jnp.float32)
    w_avg = jnp.transpose(w[:, :C])     # (C, Cout) — avg channels come first in the cat
    w_max = jnp.transpose(w[:, C:])     # (C, Cout)
    b = bias.reshape(1, Cout).astype(jnp.float32)
    return w_avg, w_max, b


def _channel_attention_small_c(x, weight, bias, max_hw_tile):
    """C too small to fill sublanes: collapse (N, C) -> rows, pool rows in the kernel,
    run the tiny conv + sigmoid in XLA."""
    N, C, H, W = x.shape
    Cout = weight.shape[0]
    HW = H * W
    rows = N * C
    itemsize = x.dtype.itemsize
    budget, vmem_limit = _vmem_budgets()

    hw_cap = max(_LANE, _round_up(HW, _LANE))
    # Rows per block: fill the byte budget when HW is small, stay a multiple of 8
    # (sublane constraint of the 2-D blocks) and leave >=2 "parallel" row steps when
    # rows allow (v7x has 2 TensorCores sharding the parallel axis).
    row_tile = (budget // (2 * min(hw_cap, max_hw_tile) * itemsize) // 8) * 8
    row_tile = max(8, min(row_tile, _round_up(rows, 8)))
    if rows > 8:
        row_tile = min(row_tile, max(8, _round_up(_cdiv(rows, 2), 8)))
    rows_pad = _round_up(rows, row_tile)

    fixed = 2 * row_tile * _LANE * 4 + 4 * row_tile * 4 + 4096
    in_budget = max(budget - fixed, 2 * row_tile * _LANE * itemsize)
    hw_tile = _pick_hw_tile(HW, 2 * row_tile * itemsize, in_budget, max_hw_tile)
    HW_pad = _round_up(HW, hw_tile)
    hw_steps = HW_pad // hw_tile
    tail_valid = HW - (hw_steps - 1) * hw_tile

    x2 = x.reshape(rows, HW)
    if rows_pad != rows or HW_pad != HW:
        x2 = jnp.pad(x2, ((0, rows_pad - rows), (0, HW_pad - HW)))

    kernel = functools.partial(_row_pool_kernel, hw_valid=HW, hw_tile=hw_tile,
                               hw_steps=hw_steps, tail_valid=tail_valid)
    cost = pl.CostEstimate(
        flops=2 * rows * HW, transcendentals=0,
        bytes_accessed=rows_pad * HW_pad * itemsize + 2 * rows_pad * 4)

    avg_rows, max_rows = pl.pallas_call(
        kernel,
        out_shape=(jax.ShapeDtypeStruct((rows_pad, 1), jnp.float32),
                   jax.ShapeDtypeStruct((rows_pad, 1), jnp.float32)),
        grid_spec=pltpu.PrefetchScalarGridSpec(
            num_scalar_prefetch=0,
            grid=(rows_pad // row_tile, hw_steps),
            in_specs=[pl.BlockSpec((row_tile, hw_tile), lambda r, k: (r, k))],
            out_specs=[pl.BlockSpec((row_tile, 1), lambda r, k: (r, 0)),
                       pl.BlockSpec((row_tile, 1), lambda r, k: (r, 0))],
            scratch_shapes=[pltpu.VMEM((row_tile, _LANE), jnp.float32),
                            pltpu.VMEM((row_tile, _LANE), jnp.float32)]),
        compiler_params=pltpu.CompilerParams(
            dimension_semantics=("parallel", "arbitrary"),
            vmem_limit_bytes=vmem_limit),
        cost_estimate=cost,
    )(x2)

    avg = avg_rows[:rows, 0].reshape(N, C)
    mx = max_rows[:rows, 0].reshape(N, C)
    w_avg, w_max, b = _split_weight(weight, bias, C)
    # Tiny (N, C) x (C, Cout) conv + bias + sigmoid: negligible, done in XLA.
    y = avg @ w_avg + mx @ w_max + b
    return jax.nn.sigmoid(y).astype(x.dtype).reshape(N, Cout, 1, 1)


def _channel_attention_fused(x, weight, bias, max_hw_tile):
    """General path: (n_tile, C, hw_tile) blocks, conv + sigmoid fused in the finalize."""
    N, C, H, W = x.shape
    Cout = weight.shape[0]
    HW = H * W
    itemsize = x.dtype.itemsize
    budget, vmem_limit = _vmem_budgets()

    # Batch tile: keep >=2 "parallel" grid steps whenever N >= 2 (v7x: 2 TensorCores).
    # The output is carried as (N_pad, 1, Cout), so n_tile is free of the 8-sublane rule.
    n_tile = min(8, N)
    if N >= 2 and _cdiv(N, n_tile) < 2:
        n_tile = _cdiv(N, 2)

    def _fixed_bytes(nt):
        return (2 * nt * C * _LANE * 4          # lane-wide f32 sum/max scratch
                + 2 * C * Cout * 4 + Cout * 4   # split weights + bias (VMEM resident)
                + 2 * nt * Cout * itemsize      # double-buffered output block
                + 4096)

    while n_tile > 1 and budget - _fixed_bytes(n_tile) < 2 * n_tile * C * _LANE * itemsize:
        n_tile = max(1, n_tile // 2)
    N_pad = _round_up(N, n_tile)

    in_budget = max(budget - _fixed_bytes(n_tile), 2 * n_tile * C * _LANE * itemsize)
    hw_tile = _pick_hw_tile(HW, 2 * n_tile * C * itemsize, in_budget, max_hw_tile)
    HW_pad = _round_up(HW, hw_tile)
    hw_steps = HW_pad // hw_tile
    tail_valid = HW - (hw_steps - 1) * hw_tile

    x3 = x.reshape(N, C, HW)
    if N_pad != N or HW_pad != HW:
        x3 = jnp.pad(x3, ((0, N_pad - N), (0, 0), (0, HW_pad - HW)))

    w_avg, w_max, b = _split_weight(weight, bias, C)

    kernel = functools.partial(_fused_pool_conv_kernel, hw_valid=HW, hw_tile=hw_tile,
                               hw_steps=hw_steps, tail_valid=tail_valid)
    cost = pl.CostEstimate(
        flops=2 * N * C * HW + 2 * N * 2 * C * Cout,
        transcendentals=N * Cout,
        bytes_accessed=(N_pad * C * HW_pad * itemsize + 2 * C * Cout * 4
                        + N_pad * Cout * itemsize))

    out = pl.pallas_call(
        kernel,
        out_shape=jax.ShapeDtypeStruct((N_pad, 1, Cout), x.dtype),
        grid_spec=pltpu.PrefetchScalarGridSpec(
            num_scalar_prefetch=0,
            grid=(N_pad // n_tile, hw_steps),
            in_specs=[
                pl.BlockSpec((n_tile, C, hw_tile), lambda n, k: (n, 0, k)),
                pl.BlockSpec((C, Cout), lambda n, k: (0, 0)),
                pl.BlockSpec((C, Cout), lambda n, k: (0, 0)),
                pl.BlockSpec((1, Cout), lambda n, k: (0, 0)),
            ],
            out_specs=pl.BlockSpec((n_tile, 1, Cout), lambda n, k: (n, 0, 0)),
            scratch_shapes=[pltpu.VMEM((n_tile, C, _LANE), jnp.float32),
                            pltpu.VMEM((n_tile, C, _LANE), jnp.float32)]),
        compiler_params=pltpu.CompilerParams(
            dimension_semantics=("parallel", "arbitrary"),
            vmem_limit_bytes=vmem_limit),
        cost_estimate=cost,
    )(x3, w_avg, w_max, b)

    return out[:N, 0, :].reshape(N, Cout, 1, 1)


def channel_attention(x, weight, bias, *, max_hw_tile=_MAX_HW_TILE):
    """x: (N, C, H, W); weight: (Cout, 2C, 1, 1); bias: (Cout,) -> (N, Cout, 1, 1)."""
    N, C, H, W = x.shape
    Cout = weight.shape[0]
    assert weight.shape == (Cout, 2 * C, 1, 1)
    assert bias.shape == (Cout,)
    # Small C would leave the (n, C, hw) block's sublane dim mostly padding: collapse
    # (N, C) onto the sublane axis and run the tiny conv in XLA instead.
    if C * x.dtype.itemsize < 32:
        return _channel_attention_small_c(x, weight, bias, max_hw_tile)
    return _channel_attention_fused(x, weight, bias, max_hw_tile)


# ---------------------------------------------------------------------------
# Reference + tests
# ---------------------------------------------------------------------------

def reference(x, weight, bias):
    xf = x.astype(jnp.float32)
    avg = jnp.mean(xf, axis=(2, 3))
    mx = jnp.max(xf, axis=(2, 3))
    pooled = jnp.concatenate([avg, mx], axis=1)                          # (N, 2C)
    w = weight.reshape(weight.shape[0], weight.shape[1]).astype(jnp.float32)
    y = pooled @ w.T + bias.astype(jnp.float32)
    return jax.nn.sigmoid(y).astype(x.dtype)[..., None, None]            # (N, Cout, 1, 1)


def _check(x, weight, bias, **kwargs):
    out = jax.block_until_ready(channel_attention(x, weight, bias, **kwargs))
    ref = reference(x, weight, bias)
    assert out.shape == ref.shape, (out.shape, ref.shape)
    err = float(jnp.max(jnp.abs(out - ref)))
    assert jnp.allclose(out, ref, atol=1e-5, rtol=1e-5), err
    return out


if __name__ == "__main__":
    # Primary example (module-consistent small shape): small-C collapsed path.
    k1, k2, k3 = jax.random.split(jax.random.PRNGKey(0), 3)
    N, C, H, W, Cout = 2, 4, 16, 16, 4
    x = jax.random.normal(k1, (N, C, H, W), dtype=jnp.float32)
    weight = jax.random.normal(k2, (Cout, 2 * C, 1, 1), dtype=jnp.float32) * 0.1
    bias = jax.random.normal(k3, (Cout,), dtype=jnp.float32) * 0.1
    _check(x, weight, bias)

    # Fused path: awkward H*W needing tail masking, batch padding, split parallel axis.
    k4, k5, k6 = jax.random.split(jax.random.PRNGKey(1), 3)
    x2 = jax.random.normal(k4, (3, 16, 9, 7), dtype=jnp.float32)
    w2 = jax.random.normal(k5, (6, 32, 1, 1), dtype=jnp.float32) * 0.1
    b2 = jax.random.normal(k6, (6,), dtype=jnp.float32) * 0.1
    _check(x2, w2, b2)

    # Multi-step HW reduction (forced small tile) on both paths.
    k7, k8, k9 = jax.random.split(jax.random.PRNGKey(2), 3)
    x3 = jax.random.normal(k7, (2, 16, 24, 24), dtype=jnp.float32)
    w3 = jax.random.normal(k8, (8, 32, 1, 1), dtype=jnp.float32) * 0.1
    b3 = jax.random.normal(k9, (8,), dtype=jnp.float32) * 0.1
    _check(x3, w3, b3, max_hw_tile=128)

    ka, kb, kc = jax.random.split(jax.random.PRNGKey(3), 3)
    x4 = jax.random.normal(ka, (2, 4, 20, 20), dtype=jnp.float32)
    w4 = jax.random.normal(kb, (4, 8, 1, 1), dtype=jnp.float32) * 0.1
    b4 = jax.random.normal(kc, (4,), dtype=jnp.float32) * 0.1
    _check(x4, w4, b4, max_hw_tile=128)

    print("KERNEL_OK")
</pallas_src>

<mosaic_0001>
module attributes {stable_mosaic.version = 11 : i64} {
  func.func @_row_pool_kernel(%arg0: i32, %arg1: i32, %arg2: memref<8x256xf32, #tpu.memory_space<vmem>>, %arg3: memref<8x1xf32, #tpu.memory_space<vmem>>, %arg4: memref<8x1xf32, #tpu.memory_space<vmem>>, %arg5: memref<8x128xf32, #tpu.memory_space<vmem>>, %arg6: memref<8x128xf32, #tpu.memory_space<vmem>>) attributes {dimension_semantics = [#tpu.dimension_semantics<parallel>, #tpu.dimension_semantics<arbitrary>], iteration_bounds = array<i64: 1, 1>, scalar_prefetch = 0 : i64, scratch_operands = 2 : i64, tpu.core_type = #tpu.core_type<tc>, window_params = [{transform_indices = @transform_0, window_bounds = array<i64: 8, 256>}, {transform_indices = @transform_1, window_bounds = array<i64: 8, 1>}, {transform_indices = @transform_2, window_bounds = array<i64: 8, 1>}]} {
    %c0_i32 = arith.constant 0 : i32
    %0 = arith.cmpi eq, %arg1, %c0_i32 : i32
    %1 = arith.extui %0 : i1 to i32
    %c0_i32_0 = arith.constant 0 : i32
    %2 = arith.cmpi ne, %1, %c0_i32_0 : i32
    scf.if %2 {
      %cst = arith.constant 0.000000e+00 : f32
      %20 = vector.broadcast %cst : f32 to vector<8x128xf32>
      %c0_21 = arith.constant 0 : index
      %c0_22 = arith.constant 0 : index
      %21 = vector.load %arg5[%c0_21, %c0_22] : memref<8x128xf32, #tpu.memory_space<vmem>>, vector<8x128xf32>
      tpu.vector_store %arg5[%c0_21, %c0_22], %20 {strides = array<i32>} : memref<8x128xf32, #tpu.memory_space<vmem>>, vector<8x128xf32>,
      %cst_23 = arith.constant 0xFF800000 : f32
      %22 = vector.broadcast %cst_23 : f32 to vector<8x128xf32>
      %c0_24 = arith.constant 0 : index
      %c0_25 = arith.constant 0 : index
      %23 = vector.load %arg6[%c0_24, %c0_25] : memref<8x128xf32, #tpu.memory_space<vmem>>, vector<8x128xf32>
      tpu.vector_store %arg6[%c0_24, %c0_25], %22 {strides = array<i32>} : memref<8x128xf32, #tpu.memory_space<vmem>>, vector<8x128xf32>,
    } else {
    }
    %c0 = arith.constant 0 : index
    %c0_1 = arith.constant 0 : index
    %3 = vector.load %arg2[%c0, %c0_1] : memref<8x256xf32, #tpu.memory_space<vmem>>, vector<8x128xf32>
    %c0_2 = arith.constant 0 : index
    %c0_3 = arith.constant 0 : index
    %4 = vector.load %arg5[%c0_2, %c0_3] : memref<8x128xf32, #tpu.memory_space<vmem>>, vector<8x128xf32>
    %5 = arith.addf %4, %3 : vector<8x128xf32>
    %c0_4 = arith.constant 0 : index
    %c0_5 = arith.constant 0 : index
    %6 = vector.load %arg5[%c0_4, %c0_5] : memref<8x128xf32, #tpu.memory_space<vmem>>, vector<8x128xf32>
    tpu.vector_store %arg5[%c0_4, %c0_5], %5 {strides = array<i32>} : memref<8x128xf32, #tpu.memory_space<vmem>>, vector<8x128xf32>,
    %c0_6 = arith.constant 0 : index
    %c0_7 = arith.constant 0 : index
    %7 = vector.load %arg6[%c0_6, %c0_7] : memref<8x128xf32, #tpu.memory_space<vmem>>, vector<8x128xf32>
    %8 = arith.maximumf %7, %3 : vector<8x128xf32>
    %c0_8 = arith.constant 0 : index
    %c0_9 = arith.constant 0 : index
    %9 = vector.load %arg6[%c0_8, %c0_9] : memref<8x128xf32, #tpu.memory_space<vmem>>, vector<8x128xf32>
    tpu.vector_store %arg6[%c0_8, %c0_9], %8 {strides = array<i32>} : memref<8x128xf32, #tpu.memory_space<vmem>>, vector<8x128xf32>,
    %c0_10 = arith.constant 0 : index
    %c128 = arith.constant 128 : index
    %10 = vector.load %arg2[%c0_10, %c128] : memref<8x256xf32, #tpu.memory_space<vmem>>, vector<8x128xf32>
    %c0_11 = arith.constant 0 : index
    %c0_12 = arith.constant 0 : index
    %11 = vector.load %arg5[%c0_11, %c0_12] : memref<8x128xf32, #tpu.memory_space<vmem>>, vector<8x128xf32>
    %12 = arith.addf %11, %10 : vector<8x128xf32>
    %c0_13 = arith.constant 0 : index
    %c0_14 = arith.constant 0 : index
    %13 = vector.load %arg5[%c0_13, %c0_14] : memref<8x128xf32, #tpu.memory_space<vmem>>, vector<8x128xf32>
    tpu.vector_store %arg5[%c0_13, %c0_14], %12 {strides = array<i32>} : memref<8x128xf32, #tpu.memory_space<vmem>>, vector<8x128xf32>,
    %c0_15 = arith.constant 0 : index
    %c0_16 = arith.constant 0 : index
    %14 = vector.load %arg6[%c0_15, %c0_16] : memref<8x128xf32, #tpu.memory_space<vmem>>, vector<8x128xf32>
    %15 = arith.maximumf %14, %10 : vector<8x128xf32>
    %c0_17 = arith.constant 0 : index
    %c0_18 = arith.constant 0 : index
    %16 = vector.load %arg6[%c0_17, %c0_18] : memref<8x128xf32, #tpu.memory_space<vmem>>, vector<8x128xf32>
    tpu.vector_store %arg6[%c0_17, %c0_18], %15 {strides = array<i32>} : memref<8x128xf32, #tpu.memory_space<vmem>>, vector<8x128xf32>,
    %c0_i32_19 = arith.constant 0 : i32
    %17 = arith.cmpi eq, %arg1, %c0_i32_19 : i32
    %18 = arith.extui %17 : i1 to i32
    %c0_i32_20 = arith.constant 0 : i32
    %19 = arith.cmpi ne, %18, %c0_i32_20 : i32
    scf.if %19 {
      %c0_21 = arith.constant 0 : index
      %c0_22 = arith.constant 0 : index
      %20 = vector.load %arg5[%c0_21, %c0_22] : memref<8x128xf32, #tpu.memory_space<vmem>>, vector<8x128xf32>
      %cst = arith.constant dense<0.000000e+00> : vector<8xf32>
      %21 = vector.multi_reduction <add>, %20, %cst [1] : vector<8x128xf32> to vector<8xf32>
      %22 = vector.shape_cast %21 : vector<8xf32> to vector<8x1xf32>
      %cst_23 = arith.constant 3.906250e-03 : f32
      %23 = vector.broadcast %cst_23 : f32 to vector<8x1xf32>
      %24 = arith.mulf %22, %23 : vector<8x1xf32>
      %c0_24 = arith.constant 0 : index
      %c0_25 = arith.constant 0 : index
      %25 = vector.load %arg3[%c0_24, %c0_25] : memref<8x1xf32, #tpu.memory_space<vmem>>, vector<8x1xf32>
      tpu.vector_store %arg3[%c0_24, %c0_25], %24 {strides = array<i32>} : memref<8x1xf32, #tpu.memory_space<vmem>>, vector<8x1xf32>,
      %c0_26 = arith.constant 0 : index
      %c0_27 = arith.constant 0 : index
      %26 = vector.load %arg6[%c0_26, %c0_27] : memref<8x128xf32, #tpu.memory_space<vmem>>, vector<8x128xf32>
      %cst_28 = arith.constant dense<0xFF800000> : vector<8xf32>
      %27 = vector.multi_reduction <maximumf>, %26, %cst_28 [1] : vector<8x128xf32> to vector<8xf32>
      %28 = vector.shape_cast %27 : vector<8xf32> to vector<8x1xf32>
      %c0_29 = arith.constant 0 : index
      %c0_30 = arith.constant 0 : index
      %29 = vector.load %arg4[%c0_29, %c0_30] : memref<8x1xf32, #tpu.memory_space<vmem>>, vector<8x1xf32>
      tpu.vector_store %arg4[%c0_29, %c0_30], %28 {strides = array<i32>} : memref<8x1xf32, #tpu.memory_space<vmem>>, vector<8x1xf32>,
    } else {
    }
    return
  }
  func.func @transform_0(%arg0: i32, %arg1: i32) -> (i32, i32) {
    %c0_i32 = arith.constant 0 : i32
    return %arg0, %arg1 : i32, i32
  }
  func.func @transform_1(%arg0: i32, %arg1: i32) -> (i32, i32) {
    %c0_i32 = arith.constant 0 : i32
    %c0_i32_0 = arith.constant 0 : i32
    return %arg0, %c0_i32 : i32, i32
  }
  func.func @transform_2(%arg0: i32, %arg1: i32) -> (i32, i32) {
    %c0_i32 = arith.constant 0 : i32
    %c0_i32_0 = arith.constant 0 : i32
    return %arg0, %c0_i32 : i32, i32
  }
}

</mosaic_0001>

<llo_original>
// kernel: tpu_custom_call.1
$region0: #{tpu_custom_call.1}
  #allocation0 [shape = 'u32[]', space=smem, size = 0x4, offset = 0x4, fixed_abs, tag = 'smem constant byte address 0x4 - core index']
  #allocation1 [shape = 'u32[144,128]{1,0:T(1,128)}', space=vmem, size = 0x12000, scoped, tag = 'internal scratch']
  #allocation2 [shape = 'f32[8,128]{1,0:T(8,128)}', space=vmem, size = 0x1000, scoped, tag = 'scratch operand']
  #allocation3 [shape = 'f32[8,128]{1,0:T(8,128)}', space=vmem, size = 0x1000, scoped, tag = 'scratch operand']
  %s0 = inlined_call_operand.hbm [shape: f32[8,256], index: 0, kind: input, shape index: {}]
  %s1 = inlined_call_operand.vmem [shape: f32[8,1], index: 1, kind: output, shape index: {0}]
  %s2 = inlined_call_operand.vmem [shape: f32[8,1], index: 2, kind: output, shape index: {1}]
  %3 = xla_tuple %s1, %s2
  %s4 = sld [smem:[#allocation0]]
  $region34: #{tpu_custom_call.1} parent=0
    _
  %s6 = ssub.s32 1, %s4
  %s7 = scalar_select 0, %s6, %s4
  $region1: #{tpu_custom_call.1} parent=0
    #allocation4 [shape = 'u8[8192]{0}', space=vmem, size = 0x2000, scoped, tag = 'input window, operand 0, single buffered']
    #allocation5 [shape = 's32[1]{0}', space=sflag, size = 0x4, scoped, tag = 'scoped memory for tpu_custom_call.1']
    %8 = vsyncpa [#allocation5], 0
    // Predicated region
    $region2: #{tpu_custom_call.1} parent=1 // pred_check
      _
    $region3: #{tpu_custom_call.1} parent=1 // pred_check_branch
      %10 = sbr.rel (0) target = $region5
    $region4: #{tpu_custom_call.1} parent=1 // pred_region
      %s12 = ssub.s32 256, 256
      %13 = vsyncadd [#allocation5], %s12
      %s15 = sshll.u32 [#allocation4], 4
      %s16 = int_to_ptr.vmem [resolvable:$true] %s15
      %18 = dma.hbm_to_vmem [thread:$0]  %s0, 256, %s16, [#allocation5]
    $region5: #{tpu_custom_call.1} parent=1 // pred_fallthru
      _
    // Predicated region
    $region6: #{tpu_custom_call.1} parent=1 // pred_check
      _
    $region7: #{tpu_custom_call.1} parent=1 // pred_check_branch
      %20 = sbr.rel (0) target = $region9
    $region8: #{tpu_custom_call.1} parent=1 // pred_region
      %21 = dma.done [#allocation5], 256
    $region9: #{tpu_custom_call.1} parent=1 // pred_fallthru
      _
    %p22 = scmp.eq.s32.totalorder 0, 0
    // Predicated region
    $region10: #{tpu_custom_call.1} parent=1 // pred_check
      %p23 = pneg %p22
    $region11: #{tpu_custom_call.1} parent=1 // pred_check_branch
      %25 = sbr.rel (%p23) target = $region13
    $region12: #{tpu_custom_call.1} parent=1 // pred_region
      %26 = vst [vmem:[#allocation2] sm:$0xff] 0.0
      %27 = vst [vmem:[#allocation3] sm:$0xff] -inf
    $region13: #{tpu_custom_call.1} parent=1 // pred_fallthru
      _
    %v28 = vld [vmem:[#allocation4] sm:$0xff]
    %v29 = vld [vmem:[#allocation2] sm:$0xff]
    %v30 = vadd.f32 %v29, %v28
    %31 = vst [vmem:[#allocation2] sm:$0xff] %v30
    %v32 = vld [vmem:[#allocation3] sm:$0xff]
    %v33 = vmax.f32 %v32, %v28
    %34 = vst [vmem:[#allocation3] sm:$0xff] %v33
    %v35 = vld [vmem:[#allocation4 + $0x8] sm:$0xff]
    %v36 = vld [vmem:[#allocation2] sm:$0xff]
    %v37 = vadd.f32 %v36, %v35
    %38 = vst [vmem:[#allocation2] sm:$0xff] %v37
    %v39 = vld [vmem:[#allocation3] sm:$0xff]
    %v40 = vmax.f32 %v39, %v35
    %41 = vst [vmem:[#allocation3] sm:$0xff] %v40
    // Predicated region
    $region14: #{tpu_custom_call.1} parent=1 // pred_check
      %p42 = pneg %p22
    $region15: #{tpu_custom_call.1} parent=1 // pred_check_branch
      %44 = sbr.rel (%p42) target = $region17
    $region16: #{tpu_custom_call.1} parent=1 // pred_region
      %v45 = vld [vmem:[#allocation2] sm:$0xff]
      %46 = vadd.xlane.f32.xlu0 %v45
      %v47 = vpop.xlane.xlu0 %46
      %v48 = vmul.f32 %v47, 0.00390625
      %vm49 = vcmask 7168
      %50 = vst.msk [vmem:[%s1] sm:$0xff] %vm49, %v48
      %v51 = vld [vmem:[#allocation3] sm:$0xff]
      %52 = vmax.xlane.f32.xlu0 %v51
      %v53 = vpop.xlane.xlu0 %52
      %54 = vst.msk [vmem:[%s2] sm:$0xff] %vm49, %v53
    $region17: #{tpu_custom_call.1} parent=1 // pred_fallthru
      _
    // Predicated region
    $region18: #{tpu_custom_call.1} parent=1 // pred_check
      _
    $region19: #{tpu_custom_call.1} parent=1 // pred_check_branch
      %56 = sbr.rel (0) target = $region21
    $region20: #{tpu_custom_call.1} parent=1 // pred_region
      _
    $region21: #{tpu_custom_call.1} parent=1 // pred_fallthru
      _
    // Predicated region
    $region22: #{tpu_custom_call.1} parent=1 // pred_check
      _
    $region23: #{tpu_custom_call.1} parent=1 // pred_check_branch
      %58 = sbr.rel (0) target = $region25
    $region24: #{tpu_custom_call.1} parent=1 // pred_region
      _
    $region25: #{tpu_custom_call.1} parent=1 // pred_fallthru
      _
    // Predicated region
    $region26: #{tpu_custom_call.1} parent=1 // pred_check
      _
    $region27: #{tpu_custom_call.1} parent=1 // pred_check_branch
      %60 = sbr.rel (0) target = $region29
    $region28: #{tpu_custom_call.1} parent=1 // pred_region
      _
    $region29: #{tpu_custom_call.1} parent=1 // pred_fallthru
      _
    // Predicated region
    $region30: #{tpu_custom_call.1} parent=1 // pred_check
      _
    $region31: #{tpu_custom_call.1} parent=1 // pred_check_branch
      %62 = sbr.rel (0) target = $region33
    $region32: #{tpu_custom_call.1} parent=1 // pred_region
      _
    $region33: #{tpu_custom_call.1} parent=1 // pred_fallthru
      _
    %63 = vsyncpa [#allocation5], 1

</llo_original>
